<compile_context>
chip_gen: v6e
topology: v6e:2x2x1
jax: 0.10.0
libtpu: 0.0.40
codegen_flags: <defaults>
</compile_context>

<pallas_src>
import functools

import jax
import jax.numpy as jnp
from jax.experimental import pallas as pl
from jax.experimental.pallas import tpu as pltpu

LANE = 128
SUBLANE_PACK = 16          # bf16 packs 16 rows per sublane group
_MIB = 1024 * 1024


def _round_up(x: int, m: int) -> int:
    return (x + m - 1) // m * m


def _vmem_capacity_bytes() -> int:
    try:
        return int(pltpu.get_tpu_info().vmem_capacity_bytes)
    except Exception:
        return 64 * _MIB    # v7x worst case; conservative default everywhere


# --------------------------------------------------------------------------
# Kernels
# --------------------------------------------------------------------------
def _fused_kernel(x_ref, w1_ref, b1_ref, w2_ref, b2_ref, o_ref):
    # linear1: (tn, d_in) @ (d_in, h) -> f32 (tn, h); weights pre-transposed so
    # the RHS is contracted on axis 0 (no XLU transpose inside the loop).
    h = jnp.dot(x_ref[...], w1_ref[...], preferred_element_type=jnp.float32)
    h = jnp.maximum(h + b1_ref[...], 0.0)                  # bias + clamp(min=0)
    # linear2: (tn, h) @ (h, d_out) -> f32 (tn, d_out)
    y = jnp.dot(h.astype(w2_ref.dtype), w2_ref[...],
                preferred_element_type=jnp.float32)
    o_ref[...] = (y + b2_ref[...]).astype(o_ref.dtype)


def _h_tiled_kernel(x_ref, w1_ref, b1_ref, w2_ref, b2_ref, o_ref, acc_ref):
    # Streams H in chunks (grid axis 1, "arbitrary"); exact because ReLU and
    # the layer-1 bias are elementwise over H and layer 2 sums over H.
    hk = pl.program_id(1)

    @pl.when(hk == 0)
    def _init():
        acc_ref[...] = jnp.zeros_like(acc_ref)

    h = jnp.dot(x_ref[...], w1_ref[...], preferred_element_type=jnp.float32)
    h = jnp.maximum(h + b1_ref[...], 0.0)
    acc_ref[...] += jnp.dot(h.astype(w2_ref.dtype), w2_ref[...],
                            preferred_element_type=jnp.float32)

    @pl.when(hk == pl.num_programs(1) - 1)
    def _finalize():
        o_ref[...] = (acc_ref[...] + b2_ref[...]).astype(o_ref.dtype)


# --------------------------------------------------------------------------
# One-time (model-load) parameter preparation
# --------------------------------------------------------------------------
def prepare_params(w1, b1, w2, b2, *, compute_dtype=jnp.bfloat16):
    """Pad to lane-dense multiples of 128, cast matmul operands, pre-transpose.

    w1: (H, D_in), b1: (H,), w2: (D_out, H), b2: (D_out,).
    Zero padding keeps the math exact (padded inputs hit zero weights,
    relu(0) = 0 contributes nothing to layer 2).
    """
    H, D_in = w1.shape
    D_out = w2.shape[0]
    d_in_p, h_p, d_out_p = (_round_up(d, LANE) for d in (D_in, H, D_out))
    f32 = jnp.float32
    w1t = jnp.zeros((d_in_p, h_p), compute_dtype).at[:D_in, :H].set(
        w1.T.astype(compute_dtype))
    w2t = jnp.zeros((h_p, d_out_p), compute_dtype).at[:H, :D_out].set(
        w2.T.astype(compute_dtype))
    b1p = jnp.zeros((1, h_p), f32).at[0, :H].set(b1.astype(f32))
    b2p = jnp.zeros((1, d_out_p), f32).at[0, :D_out].set(b2.astype(f32))
    return {"w1t": w1t, "b1": b1p, "w2t": w2t, "b2": b2p, "d_out": D_out}


# --------------------------------------------------------------------------
# VMEM budgeting
# --------------------------------------------------------------------------
def _resident_vmem_bytes(tn, d_in_p, h_p, d_out_p, cdt_sz, out_sz, wbufs):
    x_io = 2 * tn * d_in_p * cdt_sz                       # double-buffered x
    o_io = 2 * tn * d_out_p * out_sz                      # double-buffered out
    w = wbufs * (d_in_p * h_p + h_p * d_out_p) * cdt_sz   # resident weights
    b = wbufs * (h_p + d_out_p) * 4
    inter = tn * h_p * (4 + cdt_sz)                       # f32 h + cast copy
    return x_io + o_io + w + b + inter


def _h_tiled_vmem_bytes(tn, th, d_in_p, d_out_p, cdt_sz, out_sz):
    x_io = 2 * tn * d_in_p * cdt_sz
    o_io = 2 * tn * d_out_p * out_sz
    w = 2 * (d_in_p * th + th * d_out_p) * cdt_sz         # streamed weight tiles
    b = 2 * th * 4 + 2 * d_out_p * 4
    inter = tn * th * (4 + cdt_sz)
    acc = tn * d_out_p * 4
    return x_io + o_io + w + b + inter + acc


# --------------------------------------------------------------------------
# Forward pass
# --------------------------------------------------------------------------
@functools.partial(
    jax.jit,
    static_argnames=("d_out", "tile_n", "weight_buffer_count", "force_h_tile",
                     "out_dtype"))
def _two_layer_net_impl(x, w1t, b1, w2t, b2, *, d_out, tile_n,
                        weight_buffer_count, force_h_tile, out_dtype):
    N, D_in = x.shape
    d_in_p, h_p = w1t.shape
    d_out_p = w2t.shape[1]
    cdt = w1t.dtype
    cdt_sz = jnp.dtype(cdt).itemsize
    odt = jnp.dtype(out_dtype) if out_dtype is not None else jnp.dtype(x.dtype)
    out_sz = odt.itemsize

    vmem_cap = _vmem_capacity_bytes()
    ceiling = (vmem_cap * 3) // 4     # ~48 MiB on v7x, ~96 MiB on v5e/v6e

    # N tile: target >= 2 grid steps when N allows (v7x megacore split) and
    # keep it a multiple of 16 so bf16 x-tiles fill packed sublanes.
    tn = max(SUBLANE_PACK,
             min(int(tile_n), _round_up(pl.cdiv(N, 2), SUBLANE_PACK)))
    while tn > SUBLANE_PACK and _resident_vmem_bytes(
            tn, d_in_p, h_p, d_out_p, cdt_sz, out_sz,
            weight_buffer_count) > ceiling:
        tn = max(SUBLANE_PACK, _round_up(tn // 2, SUBLANE_PACK))

    resident_need = _resident_vmem_bytes(tn, d_in_p, h_p, d_out_p, cdt_sz,
                                         out_sz, weight_buffer_count)
    use_h_tile = (force_h_tile is not None) or (resident_need > ceiling)

    n_p = _round_up(N, tn)
    grid_n = n_p // tn

    # Skip the x pad when shapes are already aligned (just a cast).
    if N == n_p and D_in == d_in_p:
        xp = x.astype(cdt)
    else:
        xp = jnp.zeros((n_p, d_in_p), cdt).at[:N, :D_in].set(x.astype(cdt))

    flops = 2 * n_p * (d_in_p * h_p + h_p * d_out_p)
    bytes_accessed = (xp.size * cdt_sz + w1t.size * cdt_sz + w2t.size * cdt_sz
                      + b1.size * 4 + b2.size * 4 + n_p * d_out_p * out_sz)
    cost = pl.CostEstimate(flops=flops, transcendentals=0,
                           bytes_accessed=bytes_accessed)

    if not use_h_tile:
        # -------- path A: weights VMEM-resident, grid over N only ----------
        def const2d(shape):
            if weight_buffer_count == 1:
                return pl.BlockSpec(shape, lambda i: (0, 0),
                                    pipeline_mode=pl.Buffered(1))
            return pl.BlockSpec(shape, lambda i: (0, 0))

        vmem_limit = int(min(ceiling, max(resident_need + 4 * _MIB, 16 * _MIB)))
        out = pl.pallas_call(
            _fused_kernel,
            out_shape=jax.ShapeDtypeStruct((n_p, d_out_p), odt),
            grid=(grid_n,),
            in_specs=[
                pl.BlockSpec((tn, d_in_p), lambda i: (i, 0)),   # x: tiled over N
                const2d((d_in_p, h_p)),                         # w1: resident
                const2d((1, h_p)),                              # b1: resident
                const2d((h_p, d_out_p)),                        # w2: resident
                const2d((1, d_out_p)),                          # b2: resident
            ],
            out_specs=pl.BlockSpec((tn, d_out_p), lambda i: (i, 0)),
            compiler_params=pltpu.CompilerParams(
                dimension_semantics=("parallel",),
                vmem_limit_bytes=vmem_limit),
            cost_estimate=cost,
        )(xp, w1t, b1, w2t, b2)
    else:
        # -------- path B: weights too big for residency -> stream H chunks --
        if force_h_tile is not None and h_p % int(force_h_tile) == 0:
            th = int(force_h_tile)
        else:
            th = LANE
            cand = LANE
            while cand <= h_p:
                if h_p % cand == 0 and _h_tiled_vmem_bytes(
                        tn, cand, d_in_p, d_out_p, cdt_sz, out_sz) <= ceiling:
                    th = cand
                cand += LANE
        grid_h = h_p // th
        need = _h_tiled_vmem_bytes(tn, th, d_in_p, d_out_p, cdt_sz, out_sz)
        vmem_limit = int(min(ceiling, max(need + 4 * _MIB, 16 * _MIB)))
        out = pl.pallas_call(
            _h_tiled_kernel,
            out_shape=jax.ShapeDtypeStruct((n_p, d_out_p), odt),
            grid=(grid_n, grid_h),
            in_specs=[
                pl.BlockSpec((tn, d_in_p), lambda i, k: (i, 0)),   # x
                pl.BlockSpec((d_in_p, th), lambda i, k: (0, k)),   # w1 H-chunk
                pl.BlockSpec((1, th), lambda i, k: (0, k)),        # b1 H-chunk
                pl.BlockSpec((th, d_out_p), lambda i, k: (k, 0)),  # w2 H-chunk
                pl.BlockSpec((1, d_out_p), lambda i, k: (0, 0)),   # b2
            ],
            out_specs=pl.BlockSpec((tn, d_out_p), lambda i, k: (i, 0)),
            scratch_shapes=[pltpu.VMEM((tn, d_out_p), jnp.float32)],
            compiler_params=pltpu.CompilerParams(
                dimension_semantics=("parallel", "arbitrary"),
                vmem_limit_bytes=vmem_limit),
            cost_estimate=cost,
        )(xp, w1t, b1, w2t, b2)

    return out[:N, :d_out]


_RESOLVED_WEIGHT_BUFS = None   # 1 once pl.Buffered(1) is known to work, else 2


def two_layer_net(x, params, *, tile_n=512, force_h_tile=None, out_dtype=None):
    """x: (N, D_in); params from prepare_params. Returns (N, D_out)."""
    global _RESOLVED_WEIGHT_BUFS
    candidates = ((_RESOLVED_WEIGHT_BUFS,) if _RESOLVED_WEIGHT_BUFS else (1, 2))
    last_err = None
    for wbufs in candidates:
        try:
            out = _two_layer_net_impl(
                x, params["w1t"], params["b1"], params["w2t"], params["b2"],
                d_out=params["d_out"], tile_n=int(tile_n),
                weight_buffer_count=int(wbufs),
                force_h_tile=force_h_tile, out_dtype=out_dtype)
            _RESOLVED_WEIGHT_BUFS = wbufs
            return out
        except Exception as e:     # pl.Buffered(1) unsupported -> 2-deep default
            last_err = e
    raise last_err


def reference(x, w1, b1, w2, b2):
    h = jnp.maximum(x @ w1.T + b1, 0.0)
    return h @ w2.T + b2


if __name__ == "__main__":
    key = jax.random.PRNGKey(0)

    # ---- test 1: small shapes; resident-weight path (bf16 + f32 operands) ----
    N, D_in, H, D_out = 8, 32, 64, 16
    kx, kw1, kb1, kw2, kb2 = jax.random.split(key, 5)
    x = jax.random.normal(kx, (N, D_in), dtype=jnp.float32)
    bound1 = 1.0 / (D_in ** 0.5)
    w1 = jax.random.uniform(kw1, (H, D_in), jnp.float32, -bound1, bound1)
    b1 = jax.random.uniform(kb1, (H,), jnp.float32, -bound1, bound1)
    bound2 = 1.0 / (H ** 0.5)
    w2 = jax.random.uniform(kw2, (D_out, H), jnp.float32, -bound2, bound2)
    b2 = jax.random.uniform(kb2, (D_out,), jnp.float32, -bound2, bound2)
    y_ref = reference(x, w1, b1, w2, b2)

    params_bf16 = prepare_params(w1, b1, w2, b2, compute_dtype=jnp.bfloat16)
    y_bf16 = two_layer_net(x, params_bf16)
    jax.block_until_ready(y_bf16)
    assert y_bf16.shape == (N, D_out)
    assert jnp.allclose(y_bf16, y_ref, atol=2e-2, rtol=2e-2)

    params_f32 = prepare_params(w1, b1, w2, b2, compute_dtype=jnp.float32)
    y_f32 = two_layer_net(x, params_f32)
    jax.block_until_ready(y_f32)
    assert y_f32.shape == (N, D_out)
    assert jnp.allclose(y_f32, y_ref, atol=1e-5, rtol=1e-5)

    # ---- test 2: exercise the H-streamed fallback (accumulator + pl.when) ----
    N2, D_in2, H2, D_out2 = 40, 48, 320, 24   # h_p=384 -> 3 H-steps of 128
    k2 = jax.random.split(key, 6)
    x2 = jax.random.normal(k2[0], (N2, D_in2), dtype=jnp.float32)
    bb1 = 1.0 / (D_in2 ** 0.5)
    w1_2 = jax.random.uniform(k2[1], (H2, D_in2), jnp.float32, -bb1, bb1)
    b1_2 = jax.random.uniform(k2[2], (H2,), jnp.float32, -bb1, bb1)
    bb2 = 1.0 / (H2 ** 0.5)
    w2_2 = jax.random.uniform(k2[3], (D_out2, H2), jnp.float32, -bb2, bb2)
    b2_2 = jax.random.uniform(k2[4], (D_out2,), jnp.float32, -bb2, bb2)
    y2_ref = reference(x2, w1_2, b1_2, w2_2, b2_2)

    params2 = prepare_params(w1_2, b1_2, w2_2, b2_2, compute_dtype=jnp.float32)
    y2 = two_layer_net(x2, params2, force_h_tile=128)
    jax.block_until_ready(y2)
    assert y2.shape == (N2, D_out2)
    assert jnp.allclose(y2, y2_ref, atol=1e-4, rtol=1e-4)

    print("KERNEL_OK")
</pallas_src>

<mosaic_0001>
module attributes {stable_mosaic.version = 11 : i64} {
  func.func @_fused_kernel(%arg0: i32, %arg1: memref<16x128xbf16, #tpu.memory_space<vmem>>, %arg2: memref<128x128xbf16, #tpu.memory_space<vmem>>, %arg3: memref<1x128xf32, #tpu.memory_space<vmem>>, %arg4: memref<128x128xbf16, #tpu.memory_space<vmem>>, %arg5: memref<1x128xf32, #tpu.memory_space<vmem>>, %arg6: memref<16x128xf32, #tpu.memory_space<vmem>>) attributes {dimension_semantics = [#tpu.dimension_semantics<parallel>], iteration_bounds = array<i64: 1>, scalar_prefetch = 0 : i64, scratch_operands = 0 : i64, tpu.core_type = #tpu.core_type<tc>, window_params = [{transform_indices = @transform_0, window_bounds = array<i64: 16, 128>}, {pipeline_mode = #tpu.pipeline_mode<synchronous>, transform_indices = @transform_1, window_bounds = array<i64: 128, 128>}, {pipeline_mode = #tpu.pipeline_mode<synchronous>, transform_indices = @transform_2, window_bounds = array<i64: 1, 128>}, {pipeline_mode = #tpu.pipeline_mode<synchronous>, transform_indices = @transform_3, window_bounds = array<i64: 128, 128>}, {pipeline_mode = #tpu.pipeline_mode<synchronous>, transform_indices = @transform_4, window_bounds = array<i64: 1, 128>}, {transform_indices = @transform_5, window_bounds = array<i64: 16, 128>}]} {
    %c0 = arith.constant 0 : index
    %c0_0 = arith.constant 0 : index
    %0 = vector.load %arg1[%c0, %c0_0] : memref<16x128xbf16, #tpu.memory_space<vmem>>, vector<16x128xbf16>
    %c0_1 = arith.constant 0 : index
    %c0_2 = arith.constant 0 : index
    %1 = vector.load %arg2[%c0_1, %c0_2] : memref<128x128xbf16, #tpu.memory_space<vmem>>, vector<128x128xbf16>
    %cst = arith.constant dense<0.000000e+00> : vector<16x128xf32>
    %2 = tpu.matmul %0, %1, %cst {dimension_numbers = #tpu.dot_dimension_numbers<[1], [0], [0], [1], [0, 0, 1, 1], [], []>} : vector<16x128xbf16>, vector<128x128xbf16>, vector<16x128xf32> -> vector<16x128xf32>
    %c0_3 = arith.constant 0 : index
    %c0_4 = arith.constant 0 : index
    %3 = vector.load %arg3[%c0_3, %c0_4] : memref<1x128xf32, #tpu.memory_space<vmem>>, vector<1x128xf32>
    %4 = vector.broadcast %3 : vector<1x128xf32> to vector<16x128xf32>
    %5 = arith.addf %2, %4 : vector<16x128xf32>
    %cst_5 = arith.constant 0.000000e+00 : f32
    %6 = vector.broadcast %cst_5 : f32 to vector<16x128xf32>
    %7 = arith.maximumf %5, %6 : vector<16x128xf32>
    %8 = arith.truncf %7 : vector<16x128xf32> to vector<16x128xbf16>
    %c0_6 = arith.constant 0 : index
    %c0_7 = arith.constant 0 : index
    %9 = vector.load %arg4[%c0_6, %c0_7] : memref<128x128xbf16, #tpu.memory_space<vmem>>, vector<128x128xbf16>
    %cst_8 = arith.constant dense<0.000000e+00> : vector<16x128xf32>
    %10 = tpu.matmul %8, %9, %cst_8 {dimension_numbers = #tpu.dot_dimension_numbers<[1], [0], [0], [1], [0, 0, 1, 1], [], []>} : vector<16x128xbf16>, vector<128x128xbf16>, vector<16x128xf32> -> vector<16x128xf32>
    %c0_9 = arith.constant 0 : index
    %c0_10 = arith.constant 0 : index
    %11 = vector.load %arg5[%c0_9, %c0_10] : memref<1x128xf32, #tpu.memory_space<vmem>>, vector<1x128xf32>
    %12 = vector.broadcast %11 : vector<1x128xf32> to vector<16x128xf32>
    %13 = arith.addf %10, %12 : vector<16x128xf32>
    %c0_11 = arith.constant 0 : index
    %c0_12 = arith.constant 0 : index
    %14 = vector.load %arg6[%c0_11, %c0_12] : memref<16x128xf32, #tpu.memory_space<vmem>>, vector<16x128xf32>
    tpu.vector_store %arg6[%c0_11, %c0_12], %13 {strides = array<i32>} : memref<16x128xf32, #tpu.memory_space<vmem>>, vector<16x128xf32>,
    return
  }
  func.func @transform_0(%arg0: i32) -> (i32, i32) {
    %c0_i32 = arith.constant 0 : i32
    %c0_i32_0 = arith.constant 0 : i32
    return %arg0, %c0_i32 : i32, i32
  }
  func.func @transform_1(%arg0: i32) -> (i32, i32) {
    %c0_i32 = arith.constant 0 : i32
    %c0_i32_0 = arith.constant 0 : i32
    %c0_i32_1 = arith.constant 0 : i32
    return %c0_i32, %c0_i32_0 : i32, i32
  }
  func.func @transform_2(%arg0: i32) -> (i32, i32) {
    %c0_i32 = arith.constant 0 : i32
    %c0_i32_0 = arith.constant 0 : i32
    %c0_i32_1 = arith.constant 0 : i32
    return %c0_i32, %c0_i32_0 : i32, i32
  }
  func.func @transform_3(%arg0: i32) -> (i32, i32) {
    %c0_i32 = arith.constant 0 : i32
    %c0_i32_0 = arith.constant 0 : i32
    %c0_i32_1 = arith.constant 0 : i32
    return %c0_i32, %c0_i32_0 : i32, i32
  }
  func.func @transform_4(%arg0: i32) -> (i32, i32) {
    %c0_i32 = arith.constant 0 : i32
    %c0_i32_0 = arith.constant 0 : i32
    %c0_i32_1 = arith.constant 0 : i32
    return %c0_i32, %c0_i32_0 : i32, i32
  }
  func.func @transform_5(%arg0: i32) -> (i32, i32) {
    %c0_i32 = arith.constant 0 : i32
    %c0_i32_0 = arith.constant 0 : i32
    return %arg0, %c0_i32 : i32, i32
  }
}

module attributes {stable_mosaic.version = 11 : i64} {
  func.func @_fused_kernel(%arg0: i32, %arg1: memref<16x128xbf16, #tpu.memory_space<vmem>>, %arg2: memref<128x128xbf16, #tpu.memory_space<vmem>>, %arg3: memref<1x128xf32, #tpu.memory_space<vmem>>, %arg4: memref<128x128xbf16, #tpu.memory_space<vmem>>, %arg5: memref<1x128xf32, #tpu.memory_space<vmem>>, %arg6: memref<16x128xf32, #tpu.memory_space<vmem>>) attributes {dimension_semantics = [#tpu.dimension_semantics<parallel>], iteration_bounds = array<i64: 1>, scalar_prefetch = 0 : i64, scratch_operands = 0 : i64, tpu.core_type = #tpu.core_type<tc>, window_params = [{transform_indices = @transform_0, window_bounds = array<i64: 16, 128>}, {pipeline_mode = #tpu.pipeline_mode<synchronous>, transform_indices = @transform_1, window_bounds = array<i64: 128, 128>}, {pipeline_mode = #tpu.pipeline_mode<synchronous>, transform_indices = @transform_2, window_bounds = array<i64: 1, 128>}, {pipeline_mode = #tpu.pipeline_mode<synchronous>, transform_indices = @transform_3, window_bounds = array<i64: 128, 128>}, {pipeline_mode = #tpu.pipeline_mode<synchronous>, transform_indices = @transform_4, window_bounds = array<i64: 1, 128>}, {transform_indices = @transform_5, window_bounds = array<i64: 16, 128>}]} {
    %c0 = arith.constant 0 : index
    %c0_0 = arith.constant 0 : index
    %0 = vector.load %arg1[%c0, %c0_0] : memref<16x128xbf16, #tpu.memory_space<vmem>>, vector<16x128xbf16>
    %c0_1 = arith.constant 0 : index
    %c0_2 = arith.constant 0 : index
    %1 = vector.load %arg2[%c0_1, %c0_2] : memref<128x128xbf16, #tpu.memory_space<vmem>>, vector<128x128xbf16>
    %cst = arith.constant dense<0.000000e+00> : vector<16x128xf32>
    %2 = tpu.matmul %0, %1, %cst {dimension_numbers = #tpu.dot_dimension_numbers<[1], [0], [0], [1], [0, 0, 1, 1], [], []>} : vector<16x128xbf16>, vector<128x128xbf16>, vector<16x128xf32> -> vector<16x128xf32>
    %c0_3 = arith.constant 0 : index
    %c0_4 = arith.constant 0 : index
    %3 = vector.load %arg3[%c0_3, %c0_4] : memref<1x128xf32, #tpu.memory_space<vmem>>, vector<1x128xf32>
    %4 = vector.broadcast %3 : vector<1x128xf32> to vector<16x128xf32>
    %5 = arith.addf %2, %4 : vector<16x128xf32>
    %cst_5 = arith.constant 0.000000e+00 : f32
    %6 = vector.broadcast %cst_5 : f32 to vector<16x128xf32>
    %7 = arith.maximumf %5, %6 : vector<16x128xf32>
    %8 = arith.truncf %7 : vector<16x128xf32> to vector<16x128xbf16>
    %c0_6 = arith.constant 0 : index
    %c0_7 = arith.constant 0 : index
    %9 = vector.load %arg4[%c0_6, %c0_7] : memref<128x128xbf16, #tpu.memory_space<vmem>>, vector<128x128xbf16>
    %cst_8 = arith.constant dense<0.000000e+00> : vector<16x128xf32>
    %10 = tpu.matmul %8, %9, %cst_8 {dimension_numbers = #tpu.dot_dimension_numbers<[1], [0], [0], [1], [0, 0, 1, 1], [], []>} : vector<16x128xbf16>, vector<128x128xbf16>, vector<16x128xf32> -> vector<16x128xf32>
    %c0_9 = arith.constant 0 : index
    %c0_10 = arith.constant 0 : index
    %11 = vector.load %arg5[%c0_9, %c0_10] : memref<1x128xf32, #tpu.memory_space<vmem>>, vector<1x128xf32>
    %12 = vector.broadcast %11 : vector<1x128xf32> to vector<16x128xf32>
    %13 = arith.addf %10, %12 : vector<16x128xf32>
    %c0_11 = arith.constant 0 : index
    %c0_12 = arith.constant 0 : index
    %14 = vector.load %arg6[%c0_11, %c0_12] : memref<16x128xf32, #tpu.memory_space<vmem>>, vector<16x128xf32>
    tpu.vector_store %arg6[%c0_11, %c0_12], %13 {strides = array<i32>} : memref<16x128xf32, #tpu.memory_space<vmem>>, vector<16x128xf32>,
    return
  }
  func.func @transform_0(%arg0: i32) -> (i32, i32) {
    %c0_i32 = arith.constant 0 : i32
    %c0_i32_0 = arith.constant 0 : i32
    return %arg0, %c0_i32 : i32, i32
  }
  func.func @transform_1(%arg0: i32) -> (i32, i32) {
    %c0_i32 = arith.constant 0 : i32
    %c0_i32_0 = arith.constant 0 : i32
    %c0_i32_1 = arith.constant 0 : i32
    return %c0_i32, %c0_i32_0 : i32, i32
  }
  func.func @transform_2(%arg0: i32) -> (i32, i32) {
    %c0_i32 = arith.constant 0 : i32
    %c0_i32_0 = arith.constant 0 : i32
    %c0_i32_1 = arith.constant 0 : i32
    return %c0_i32, %c0_i32_0 : i32, i32
  }
  func.func @transform_3(%arg0: i32) -> (i32, i32) {
    %c0_i32 = arith.constant 0 : i32
    %c0_i32_0 = arith.constant 0 : i32
    %c0_i32_1 = arith.constant 0 : i32
    return %c0_i32, %c0_i32_0 : i32, i32
  }
  func.func @transform_4(%arg0: i32) -> (i32, i32) {
    %c0_i32 = arith.constant 0 : i32
    %c0_i32_0 = arith.constant 0 : i32
    %c0_i32_1 = arith.constant 0 : i32
    return %c0_i32, %c0_i32_0 : i32, i32
  }
  func.func @transform_5(%arg0: i32) -> (i32, i32) {
    %c0_i32 = arith.constant 0 : i32
    %c0_i32_0 = arith.constant 0 : i32
    return %arg0, %c0_i32 : i32, i32
  }
}

</mosaic_0001>

<llo_original>
// kernel: _two_layer_net_impl.1
$region0: #{_two_layer_net_impl.1}
  #allocation0 [shape = 'u32[]', space=smem, size = 0x4, offset = 0x4, fixed_abs, tag = 'smem constant byte address 0x4 - core index']
  #allocation1 [shape = 'u32[144,128]{1,0:T(1,128)}', space=vmem, size = 0x12000, scoped, tag = 'internal scratch']
  %s0 = inlined_call_operand.vmem [shape: bf16[16,128], index: 0, kind: input, shape index: {}]
  %s1 = inlined_call_operand.hbm [shape: bf16[128,128], index: 1, kind: input, shape index: {}]
  %s2 = inlined_call_operand.vmem [shape: f32[1,128], index: 2, kind: input, shape index: {}]
  %s3 = inlined_call_operand.hbm [shape: bf16[128,128], index: 3, kind: input, shape index: {}]
  %s4 = inlined_call_operand.vmem [shape: f32[1,128], index: 4, kind: input, shape index: {}]
  %s5 = inlined_call_operand.vmem [shape: f32[16,128], index: 5, kind: output, shape index: {}]
  %s6 = sld [smem:[#allocation0]]
  $region38: #{_two_layer_net_impl.1} parent=0
    _
  %s8 = ssub.s32 1, %s6
  %s9 = scalar_select 0, %s8, %s6
  $region1: #{_two_layer_net_impl.1} parent=0
    #allocation2 [shape = 'u8[32768]{0}', space=vmem, size = 0x8000, scoped, tag = 'input window, operand 1, single buffered']
    #allocation3 [shape = 's32[1]{0}', space=sflag, size = 0x4, scoped, tag = 'scoped memory for _two_layer_net_impl.1']
    #allocation4 [shape = 'u8[32768]{0}', space=vmem, size = 0x8000, scoped, tag = 'input window, operand 3, single buffered']
    #allocation5 [shape = 's32[1]{0}', space=sflag, size = 0x4, scoped, tag = 'scoped memory for _two_layer_net_impl.1']
    %10 = vsyncpa [#allocation3], 0
    %11 = vsyncpa [#allocation5], 0
    // Predicated region
    $region2: #{_two_layer_net_impl.1} parent=1 // pred_check
      _
    $region3: #{_two_layer_net_impl.1} parent=1 // pred_check_branch
      %13 = sbr.rel (0) target = $region5
    $region4: #{_two_layer_net_impl.1} parent=1 // pred_region
      _
    $region5: #{_two_layer_net_impl.1} parent=1 // pred_fallthru
      _
    // Predicated region
    $region6: #{_two_layer_net_impl.1} parent=1 // pred_check
      _
    $region7: #{_two_layer_net_impl.1} parent=1 // pred_check_branch
      %15 = sbr.rel (0) target = $region9
    $region8: #{_two_layer_net_impl.1} parent=1 // pred_region
      %s17 = ssub.s32 1024, 1024
      %18 = vsyncadd [#allocation3], %s17
      %s19 = sshll.u32 [#allocation2], 4
      %s20 = int_to_ptr.vmem [resolvable:$true] %s19
      %25 = dma.hbm_to_vmem [thread:$0]  %s1, 1024, %s20, [#allocation3], 64, 64, 4
    $region9: #{_two_layer_net_impl.1} parent=1 // pred_fallthru
      _
    // Predicated region
    $region10: #{_two_layer_net_impl.1} parent=1 // pred_check
      _
    $region11: #{_two_layer_net_impl.1} parent=1 // pred_check_branch
      %27 = sbr.rel (0) target = $region13
    $region12: #{_two_layer_net_impl.1} parent=1 // pred_region
      _
    $region13: #{_two_layer_net_impl.1} parent=1 // pred_fallthru
      _
    // Predicated region
    $region14: #{_two_layer_net_impl.1} parent=1 // pred_check
      _
    $region15: #{_two_layer_net_impl.1} parent=1 // pred_check_branch
      %29 = sbr.rel (0) target = $region17
    $region16: #{_two_layer_net_impl.1} parent=1 // pred_region
      %s31 = ssub.s32 1024, 1024
      %32 = vsyncadd [#allocation5], %s31
      %s33 = sshll.u32 [#allocation4], 4
      %s34 = int_to_ptr.vmem [resolvable:$true] %s33
      %39 = dma.hbm_to_vmem [thread:$0]  %s3, 1024, %s34, [#allocation5], 64, 64, 4
    $region17: #{_two_layer_net_impl.1} parent=1 // pred_fallthru
      _
    // Predicated region
    $region18: #{_two_layer_net_impl.1} parent=1 // pred_check
      _
    $region19: #{_two_layer_net_impl.1} parent=1 // pred_check_branch
      %41 = sbr.rel (0) target = $region21
    $region20: #{_two_layer_net_impl.1} parent=1 // pred_region
      _
    $region21: #{_two_layer_net_impl.1} parent=1 // pred_fallthru
      _
    // Predicated region
    $region22: #{_two_layer_net_impl.1} parent=1 // pred_check
      _
    $region23: #{_two_layer_net_impl.1} parent=1 // pred_check_branch
      %43 = sbr.rel (0) target = $region25
    $region24: #{_two_layer_net_impl.1} parent=1 // pred_region
      %44 = dma.done [#allocation3], 1024
    $region25: #{_two_layer_net_impl.1} parent=1 // pred_fallthru
      _
    // Predicated region
    $region26: #{_two_layer_net_impl.1} parent=1 // pred_check
      _
    $region27: #{_two_layer_net_impl.1} parent=1 // pred_check_branch
      %46 = sbr.rel (0) target = $region29
    $region28: #{_two_layer_net_impl.1} parent=1 // pred_region
      %47 = dma.done [#allocation5], 1024
    $region29: #{_two_layer_net_impl.1} parent=1 // pred_fallthru
      _
    %v49 = vld [vmem:[%s0] sm:$0xf]
    %v50 = vld [vmem:[%s0 + $0x4] sm:$0xf]
    %v51 = vld [vmem:[#allocation2] sm:$0xf]
    %v52 = vld [vmem:[#allocation2 + $0x4] sm:$0xf]
    %v53 = vld [vmem:[#allocation2 + $0x8] sm:$0xf]
    %v54 = vld [vmem:[#allocation2 + $0xc] sm:$0xf]
    %v55 = vld [vmem:[#allocation2 + $0x10] sm:$0xf]
    %v56 = vld [vmem:[#allocation2 + $0x14] sm:$0xf]
    %v57 = vld [vmem:[#allocation2 + $0x18] sm:$0xf]
    %v58 = vld [vmem:[#allocation2 + $0x1c] sm:$0xf]
    %v59 = vld [vmem:[#allocation2 + $0x20] sm:$0xf]
    %v60 = vld [vmem:[#allocation2 + $0x24] sm:$0xf]
    %v61 = vld [vmem:[#allocation2 + $0x28] sm:$0xf]
    %v62 = vld [vmem:[#allocation2 + $0x2c] sm:$0xf]
    %v63 = vld [vmem:[#allocation2 + $0x30] sm:$0xf]
    %v64 = vld [vmem:[#allocation2 + $0x34] sm:$0xf]
    %v65 = vld [vmem:[#allocation2 + $0x38] sm:$0xf]
    %v66 = vld [vmem:[#allocation2 + $0x3c] sm:$0xf]
    %v67 = vld [vmem:[%s2] sm:$0x1]
    %v69 = vlaneseq
    %v70 = vshrl.u32 %v69, 7
    %v71 = vsub.s32 0, %v70
    %v72 = vrot.slane %v67, %v71
    %v76 = vunpack.c.l.b16 %v49
    %v77 = vunpack.c.l.b16 %v50
    %v78 = vpack.c.b16 %v77, %v76
    %v96 = vunpack.c.l.b16 %v51
    %v97 = vunpack.c.l.b16 %v52
    %v98 = vunpack.c.l.b16 %v53
    %v99 = vunpack.c.l.b16 %v54
    %v100 = vunpack.c.l.b16 %v55
    %v101 = vunpack.c.l.b16 %v56
    %v102 = vunpack.c.l.b16 %v57
    %v103 = vunpack.c.l.b16 %v58
    %v104 = vunpack.c.l.b16 %v59
    %v105 = vunpack.c.l.b16 %v60
    %v106 = vunpack.c.l.b16 %v61
    %v107 = vunpack.c.l.b16 %v62
    %v108 = vunpack.c.l.b16 %v63
    %v109 = vunpack.c.l.b16 %v64
    %v110 = vunpack.c.l.b16 %v65
    %v111 = vunpack.c.l.b16 %v66
    %v112 = vpack.c.b16 %v97, %v96
    %v113 = vpack.c.b16 %v99, %v98
    %v114 = vpack.c.b16 %v101, %v100
    %v115 = vpack.c.b16 %v103, %v102
    %v116 = vpack.c.b16 %v105, %v104
    %v117 = vpack.c.b16 %v107, %v106
    %v118 = vpack.c.b16 %v109, %v108
    %v119 = vpack.c.b16 %v111, %v110
    %128 = vmatprep.subr.bf16.mxu0 0
    %129 = vmatpush1.bf16.msra.mxu0 %v119
    %130 = vmatprep.subr.bf16.mxu0 0
    %131 = vmatpush1.bf16.msra.mxu0 %v118
    %132 = vmatprep.subr.bf16.mxu0 0
    %133 = vmatpush1.bf16.msra.mxu0 %v117
    %134 = vmatprep.subr.bf16.mxu0 0
    %135 = vmatpush1.bf16.msra.mxu0 %v116
    %136 = vmatprep.subr.bf16.mxu0 0
    %137 = vmatpush1.bf16.msra.mxu0 %v115
    %138 = vmatprep.subr.bf16.mxu0 0
    %139 = vmatpush1.bf16.msra.mxu0 %v114
    %140 = vmatprep.subr.bf16.mxu0 0
    %141 = vmatpush1.bf16.msra.mxu0 %v113
    %142 = vmatprep.subr.bf16.mxu0 0
    %143 = vmatpush1.bf16.msra.mxu0 %v112
    %144 = vmatprep.subr.bf16.mxu0 0
    %145 = vmatpush2.bf16.msra.mxu0 0
    %146 = vmatprep.subr.bf16.mxu0 0
    %147 = vmatpush2.bf16.msra.mxu0 0
    %148 = vmatprep.subr.bf16.mxu0 0
    %149 = vmatpush2.bf16.msra.mxu0 0
    %150 = vmatprep.subr.bf16.mxu0 0
    %151 = vmatpush2.bf16.msra.mxu0 0
    %152 = vmatprep.subr.bf16.mxu0 0
    %153 = vmatpush2.bf16.msra.mxu0 0
    %154 = vmatprep.subr.bf16.mxu0 0
    %155 = vmatpush2.bf16.msra.mxu0 0
    %156 = vmatprep.subr.bf16.mxu0 0
    %157 = vmatpush2.bf16.msra.mxu0 0
    %158 = vmatprep.subr.bf16.mxu0 0
    %159 = vmatpush2.bf16.msra.mxu0 0
    %160 = vmatprep.mubr.bf16.mxu0 0
    %161 = vmatmul.mubr.bf16.gmra.mxu0 %v78
    %v162 = vpop.f32.mrf.mxu0
    %v163 = vadd.f32 %v72, %v162
    %v164 = vpop.f32.mrf.mxu0
    %v165 = vpop.f32.mrf.mxu0
    %v166 = vadd.f32 %v72, %v165
    %v167 = vpop.f32.mrf.mxu0
    %168 = vdwg.mxu0
    %v169 = vmax.f32 %v163, 0.0
    %v170 = vmax.f32 %v166, 0.0
    %v171 = vpack.c.bf16 %v170, %v169
    %v172 = vld [vmem:[#allocation4] sm:$0xf]
    %v173 = vld [vmem:[#allocation4 + $0x4] sm:$0xf]
    %v174 = vld [vmem:[#allocation4 + $0x8] sm:$0xf]
    %v175 = vld [vmem:[#allocation4 + $0xc] sm:$0xf]
    %v176 = vld [vmem:[#allocation4 + $0x10] sm:$0xf]
    %v177 = vld [vmem:[#allocation4 + $0x14] sm:$0xf]
    %v178 = vld [vmem:[#allocation4 + $0x18] sm:$0xf]
    %v179 = vld [vmem:[#allocation4 + $0x1c] sm:$0xf]
    %v180 = vld [vmem:[#allocation4 + $0x20] sm:$0xf]
    %v181 = vld [vmem:[#allocation4 + $0x24] sm:$0xf]
    %v182 = vld [vmem:[#allocation4 + $0x28] sm:$0xf]
    %v183 = vld [vmem:[#allocation4 + $0x2c] sm:$0xf]
    %v184 = vld [vmem:[#allocation4 + $0x30] sm:$0xf]
    %v185 = vld [vmem:[#allocation4 + $0x34] sm:$0xf]
    %v186 = vld [vmem:[#allocation4 + $0x38] sm:$0xf]
    %v187 = vld [vmem:[#allocation4 + $0x3c] sm:$0xf]
    %v188 = vld [vmem:[%s4] sm:$0x1]
    %v190 = vlaneseq
    %v191 = vshrl.u32 %v190, 7
    %v192 = vsub.s32 0, %v191
    %v193 = vrot.slane %v188, %v192
    %v211 = vunpack.c.l.b16 %v172
    %v212 = vunpack.c.l.b16 %v173
    %v213 = vunpack.c.l.b16 %v174
    %v214 = vunpack.c.l.b16 %v175
    %v215 = vunpack.c.l.b16 %v176
    %v216 = vunpack.c.l.b16 %v177
    %v217 = vunpack.c.l.b16 %v178
    %v218 = vunpack.c.l.b16 %v179
    %v219 = vunpack.c.l.b16 %v180
    %v220 = vunpack.c.l.b16 %v181
    %v221 = vunpack.c.l.b16 %v182
    %v222 = vunpack.c.l.b16 %v183
    %v223 = vunpack.c.l.b16 %v184
    %v224 = vunpack.c.l.b16 %v185
    %v225 = vunpack.c.l.b16 %v186
    %v226 = vunpack.c.l.b16 %v187
    %v227 = vpack.c.b16 %v212, %v211
    %v228 = vpack.c.b16 %v214, %v213
    %v229 = vpack.c.b16 %v216, %v215
    %v230 = vpack.c.b16 %v218, %v217
    %v231 = vpack.c.b16 %v220, %v219
    %v232 = vpack.c.b16 %v222, %v221
    %v233 = vpack.c.b16 %v224, %v223
    %v234 = vpack.c.b16 %v226, %v225
    %243 = vmatprep.subr.bf16.mxu0 0
    %244 = vmatpush1.bf16.msra.mxu0 %v234
    %245 = vmatprep.subr.bf16.mxu0 0
    %246 = vmatpush1.bf16.msra.mxu0 %v233
    %247 = vmatprep.subr.bf16.mxu0 0
    %248 = vmatpush1.bf16.msra.mxu0 %v232
    %249 = vmatprep.subr.bf16.mxu0 0
    %250 = vmatpush1.bf16.msra.mxu0 %v231
    %251 = vmatprep.subr.bf16.mxu0 0
    %252 = vmatpush1.bf16.msra.mxu0 %v230
    %253 = vmatprep.subr.bf16.mxu0 0
    %254 = vmatpush1.bf16.msra.mxu0 %v229
    %255 = vmatprep.subr.bf16.mxu0 0
    %256 = vmatpush1.bf16.msra.mxu0 %v228
    %257 = vmatprep.subr.bf16.mxu0 0
    %258 = vmatpush1.bf16.msra.mxu0 %v227
    %259 = vmatprep.subr.bf16.mxu0 0
    %260 = vmatpush2.bf16.msra.mxu0 0
    %261 = vmatprep.subr.bf16.mxu0 0
    %262 = vmatpush2.bf16.msra.mxu0 0
    %263 = vmatprep.subr.bf16.mxu0 0
    %264 = vmatpush2.bf16.msra.mxu0 0
    %265 = vmatprep.subr.bf16.mxu0 0
    %266 = vmatpush2.bf16.msra.mxu0 0
    %267 = vmatprep.subr.bf16.mxu0 0
    %268 = vmatpush2.bf16.msra.mxu0 0
    %269 = vmatprep.subr.bf16.mxu0 0
    %270 = vmatpush2.bf16.msra.mxu0 0
    %271 = vmatprep.subr.bf16.mxu0 0
    %272 = vmatpush2.bf16.msra.mxu0 0
    %273 = vmatprep.subr.bf16.mxu0 0
    %274 = vmatpush2.bf16.msra.mxu0 0
    %275 = vmatprep.mubr.bf16.mxu0 0
    %276 = vmatmul.mubr.bf16.gmra.mxu0 %v171
    %v277 = vpop.f32.mrf.mxu0
    %v278 = vadd.f32 %v193, %v277
    %v279 = vpop.f32.mrf.mxu0
    %v280 = vpop.f32.mrf.mxu0
    %v281 = vadd.f32 %v193, %v280
    %v282 = vpop.f32.mrf.mxu0
    %283 = vdwg.mxu0
    %284 = vst [vmem:[%s5] sm:$0xff] %v278
    %285 = vst [vmem:[%s5 + $0x8] sm:$0xff] %v281
    // Predicated region
    $region30: #{_two_layer_net_impl.1} parent=1 // pred_check
      _
    $region31: #{_two_layer_net_impl.1} parent=1 // pred_check_branch
      %287 = sbr.rel (0) target = $region33
    $region32: #{_two_layer_net_impl.1} parent=1 // pred_region
      _
    $region33: #{_two_layer_net_impl.1} parent=1 // pred_fallthru
      _
    // Predicated region
    $region34: #{_two_layer_net_impl.1} parent=1 // pred_check
      _
    $region35: #{_two_layer_net_impl.1} parent=1 // pred_check_branch
      %289 = sbr.rel (0) target = $region37
    $region36: #{_two_layer_net_impl.1} parent=1 // pred_region
      _
    $region37: #{_two_layer_net_impl.1} parent=1 // pred_fallthru
      _
    %290 = vsyncpa [#allocation3], 1
    %291 = vsyncpa [#allocation5], 1

// kernel: _two_layer_net_impl.1
$region0: #{_two_layer_net_impl.1}
  #allocation0 [shape = 'u32[]', space=smem, size = 0x4, offset = 0x4, fixed_abs, tag = 'smem constant byte address 0x4 - core index']
  #allocation1 [shape = 'u32[144,128]{1,0:T(1,128)}', space=vmem, size = 0x12000, scoped, tag = 'internal scratch']
  %s0 = inlined_call_operand.vmem [shape: bf16[16,128], index: 0, kind: input, shape index: {}]
  %s1 = inlined_call_operand.hbm [shape: bf16[128,128], index: 1, kind: input, shape index: {}]
  %s2 = inlined_call_operand.vmem [shape: f32[1,128], index: 2, kind: input, shape index: {}]
  %s3 = inlined_call_operand.hbm [shape: bf16[128,128], index: 3, kind: input, shape index: {}]
  %s4 = inlined_call_operand.vmem [shape: f32[1,128], index: 4, kind: input, shape index: {}]
  %s5 = inlined_call_operand.vmem [shape: f32[16,128], index: 5, kind: output, shape index: {}]
  %s6 = sld [smem:[#allocation0]]
  $region38: #{_two_layer_net_impl.1} parent=0
    _
  %s8 = ssub.s32 1, %s6
  %s9 = scalar_select 0, %s8, %s6
  $region1: #{_two_layer_net_impl.1} parent=0
    #allocation2 [shape = 'u8[32768]{0}', space=vmem, size = 0x8000, scoped, tag = 'input window, operand 1, single buffered']
    #allocation3 [shape = 's32[1]{0}', space=sflag, size = 0x4, scoped, tag = 'scoped memory for _two_layer_net_impl.1']
    #allocation4 [shape = 'u8[32768]{0}', space=vmem, size = 0x8000, scoped, tag = 'input window, operand 3, single buffered']
    #allocation5 [shape = 's32[1]{0}', space=sflag, size = 0x4, scoped, tag = 'scoped memory for _two_layer_net_impl.1']
    %10 = vsyncpa [#allocation3], 0
    %11 = vsyncpa [#allocation5], 0
    // Predicated region
    $region2: #{_two_layer_net_impl.1} parent=1 // pred_check
      _
    $region3: #{_two_layer_net_impl.1} parent=1 // pred_check_branch
      %13 = sbr.rel (0) target = $region5
    $region4: #{_two_layer_net_impl.1} parent=1 // pred_region
      _
    $region5: #{_two_layer_net_impl.1} parent=1 // pred_fallthru
      _
    // Predicated region
    $region6: #{_two_layer_net_impl.1} parent=1 // pred_check
      _
    $region7: #{_two_layer_net_impl.1} parent=1 // pred_check_branch
      %15 = sbr.rel (0) target = $region9
    $region8: #{_two_layer_net_impl.1} parent=1 // pred_region
      %s17 = ssub.s32 1024, 1024
      %18 = vsyncadd [#allocation3], %s17
      %s19 = sshll.u32 [#allocation2], 4
      %s20 = int_to_ptr.vmem [resolvable:$true] %s19
      %25 = dma.hbm_to_vmem [thread:$0]  %s1, 1024, %s20, [#allocation3], 64, 64, 4
    $region9: #{_two_layer_net_impl.1} parent=1 // pred_fallthru
      _
    // Predicated region
    $region10: #{_two_layer_net_impl.1} parent=1 // pred_check
      _
    $region11: #{_two_layer_net_impl.1} parent=1 // pred_check_branch
      %27 = sbr.rel (0) target = $region13
    $region12: #{_two_layer_net_impl.1} parent=1 // pred_region
      _
    $region13: #{_two_layer_net_impl.1} parent=1 // pred_fallthru
      _
    // Predicated region
    $region14: #{_two_layer_net_impl.1} parent=1 // pred_check
      _
    $region15: #{_two_layer_net_impl.1} parent=1 // pred_check_branch
      %29 = sbr.rel (0) target = $region17
    $region16: #{_two_layer_net_impl.1} parent=1 // pred_region
      %s31 = ssub.s32 1024, 1024
      %32 = vsyncadd [#allocation5], %s31
      %s33 = sshll.u32 [#allocation4], 4
      %s34 = int_to_ptr.vmem [resolvable:$true] %s33
      %39 = dma.hbm_to_vmem [thread:$0]  %s3, 1024, %s34, [#allocation5], 64, 64, 4
    $region17: #{_two_layer_net_impl.1} parent=1 // pred_fallthru
      _
    // Predicated region
    $region18: #{_two_layer_net_impl.1} parent=1 // pred_check
      _
    $region19: #{_two_layer_net_impl.1} parent=1 // pred_check_branch
      %41 = sbr.rel (0) target = $region21
    $region20: #{_two_layer_net_impl.1} parent=1 // pred_region
      _
    $region21: #{_two_layer_net_impl.1} parent=1 // pred_fallthru
      _
    // Predicated region
    $region22: #{_two_layer_net_impl.1} parent=1 // pred_check
      _
    $region23: #{_two_layer_net_impl.1} parent=1 // pred_check_branch
      %43 = sbr.rel (0) target = $region25
    $region24: #{_two_layer_net_impl.1} parent=1 // pred_region
      %44 = dma.done [#allocation3], 1024
    $region25: #{_two_layer_net_impl.1} parent=1 // pred_fallthru
      _
    // Predicated region
    $region26: #{_two_layer_net_impl.1} parent=1 // pred_check
      _
    $region27: #{_two_layer_net_impl.1} parent=1 // pred_check_branch
      %46 = sbr.rel (0) target = $region29
    $region28: #{_two_layer_net_impl.1} parent=1 // pred_region
      %47 = dma.done [#allocation5], 1024
    $region29: #{_two_layer_net_impl.1} parent=1 // pred_fallthru
      _
    %v49 = vld [vmem:[%s0] sm:$0xf]
    %v50 = vld [vmem:[%s0 + $0x4] sm:$0xf]
    %v51 = vld [vmem:[#allocation2] sm:$0xf]
    %v52 = vld [vmem:[#allocation2 + $0x4] sm:$0xf]
    %v53 = vld [vmem:[#allocation2 + $0x8] sm:$0xf]
    %v54 = vld [vmem:[#allocation2 + $0xc] sm:$0xf]
    %v55 = vld [vmem:[#allocation2 + $0x10] sm:$0xf]
    %v56 = vld [vmem:[#allocation2 + $0x14] sm:$0xf]
    %v57 = vld [vmem:[#allocation2 + $0x18] sm:$0xf]
    %v58 = vld [vmem:[#allocation2 + $0x1c] sm:$0xf]
    %v59 = vld [vmem:[#allocation2 + $0x20] sm:$0xf]
    %v60 = vld [vmem:[#allocation2 + $0x24] sm:$0xf]
    %v61 = vld [vmem:[#allocation2 + $0x28] sm:$0xf]
    %v62 = vld [vmem:[#allocation2 + $0x2c] sm:$0xf]
    %v63 = vld [vmem:[#allocation2 + $0x30] sm:$0xf]
    %v64 = vld [vmem:[#allocation2 + $0x34] sm:$0xf]
    %v65 = vld [vmem:[#allocation2 + $0x38] sm:$0xf]
    %v66 = vld [vmem:[#allocation2 + $0x3c] sm:$0xf]
    %v67 = vld [vmem:[%s2] sm:$0x1]
    %v69 = vlaneseq
    %v70 = vshrl.u32 %v69, 7
    %v71 = vsub.s32 0, %v70
    %v72 = vrot.slane %v67, %v71
    %v76 = vunpack.c.l.b16 %v49
    %v77 = vunpack.c.l.b16 %v50
    %v78 = vpack.c.b16 %v77, %v76
    %v96 = vunpack.c.l.b16 %v51
    %v97 = vunpack.c.l.b16 %v52
    %v98 = vunpack.c.l.b16 %v53
    %v99 = vunpack.c.l.b16 %v54
    %v100 = vunpack.c.l.b16 %v55
    %v101 = vunpack.c.l.b16 %v56
    %v102 = vunpack.c.l.b16 %v57
    %v103 = vunpack.c.l.b16 %v58
    %v104 = vunpack.c.l.b16 %v59
    %v105 = vunpack.c.l.b16 %v60
    %v106 = vunpack.c.l.b16 %v61
    %v107 = vunpack.c.l.b16 %v62
    %v108 = vunpack.c.l.b16 %v63
    %v109 = vunpack.c.l.b16 %v64
    %v110 = vunpack.c.l.b16 %v65
    %v111 = vunpack.c.l.b16 %v66
    %v112 = vpack.c.b16 %v97, %v96
    %v113 = vpack.c.b16 %v99, %v98
    %v114 = vpack.c.b16 %v101, %v100
    %v115 = vpack.c.b16 %v103, %v102
    %v116 = vpack.c.b16 %v105, %v104
    %v117 = vpack.c.b16 %v107, %v106
    %v118 = vpack.c.b16 %v109, %v108
    %v119 = vpack.c.b16 %v111, %v110
    %128 = vmatprep.subr.bf16.mxu0 0
    %129 = vmatpush1.bf16.msra.mxu0 %v119
    %130 = vmatprep.subr.bf16.mxu0 0
    %131 = vmatpush1.bf16.msra.mxu0 %v118
    %132 = vmatprep.subr.bf16.mxu0 0
    %133 = vmatpush1.bf16.msra.mxu0 %v117
    %134 = vmatprep.subr.bf16.mxu0 0
    %135 = vmatpush1.bf16.msra.mxu0 %v116
    %136 = vmatprep.subr.bf16.mxu0 0
    %137 = vmatpush1.bf16.msra.mxu0 %v115
    %138 = vmatprep.subr.bf16.mxu0 0
    %139 = vmatpush1.bf16.msra.mxu0 %v114
    %140 = vmatprep.subr.bf16.mxu0 0
    %141 = vmatpush1.bf16.msra.mxu0 %v113
    %142 = vmatprep.subr.bf16.mxu0 0
    %143 = vmatpush1.bf16.msra.mxu0 %v112
    %144 = vmatprep.subr.bf16.mxu0 0
    %145 = vmatpush2.bf16.msra.mxu0 0
    %146 = vmatprep.subr.bf16.mxu0 0
    %147 = vmatpush2.bf16.msra.mxu0 0
    %148 = vmatprep.subr.bf16.mxu0 0
    %149 = vmatpush2.bf16.msra.mxu0 0
    %150 = vmatprep.subr.bf16.mxu0 0
    %151 = vmatpush2.bf16.msra.mxu0 0
    %152 = vmatprep.subr.bf16.mxu0 0
    %153 = vmatpush2.bf16.msra.mxu0 0
    %154 = vmatprep.subr.bf16.mxu0 0
    %155 = vmatpush2.bf16.msra.mxu0 0
    %156 = vmatprep.subr.bf16.mxu0 0
    %157 = vmatpush2.bf16.msra.mxu0 0
    %158 = vmatprep.subr.bf16.mxu0 0
    %159 = vmatpush2.bf16.msra.mxu0 0
    %160 = vmatprep.mubr.bf16.mxu0 0
    %161 = vmatmul.mubr.bf16.gmra.mxu0 %v78
    %v162 = vpop.f32.mrf.mxu0
    %v163 = vadd.f32 %v72, %v162
    %v164 = vpop.f32.mrf.mxu0
    %v165 = vpop.f32.mrf.mxu0
    %v166 = vadd.f32 %v72, %v165
    %v167 = vpop.f32.mrf.mxu0
    %168 = vdwg.mxu0
    %v169 = vmax.f32 %v163, 0.0
    %v170 = vmax.f32 %v166, 0.0
    %v171 = vpack.c.bf16 %v170, %v169
    %v172 = vld [vmem:[#allocation4] sm:$0xf]
    %v173 = vld [vmem:[#allocation4 + $0x4] sm:$0xf]
    %v174 = vld [vmem:[#allocation4 + $0x8] sm:$0xf]
    %v175 = vld [vmem:[#allocation4 + $0xc] sm:$0xf]
    %v176 = vld [vmem:[#allocation4 + $0x10] sm:$0xf]
    %v177 = vld [vmem:[#allocation4 + $0x14] sm:$0xf]
    %v178 = vld [vmem:[#allocation4 + $0x18] sm:$0xf]
    %v179 = vld [vmem:[#allocation4 + $0x1c] sm:$0xf]
    %v180 = vld [vmem:[#allocation4 + $0x20] sm:$0xf]
    %v181 = vld [vmem:[#allocation4 + $0x24] sm:$0xf]
    %v182 = vld [vmem:[#allocation4 + $0x28] sm:$0xf]
    %v183 = vld [vmem:[#allocation4 + $0x2c] sm:$0xf]
    %v184 = vld [vmem:[#allocation4 + $0x30] sm:$0xf]
    %v185 = vld [vmem:[#allocation4 + $0x34] sm:$0xf]
    %v186 = vld [vmem:[#allocation4 + $0x38] sm:$0xf]
    %v187 = vld [vmem:[#allocation4 + $0x3c] sm:$0xf]
    %v188 = vld [vmem:[%s4] sm:$0x1]
    %v190 = vlaneseq
    %v191 = vshrl.u32 %v190, 7
    %v192 = vsub.s32 0, %v191
    %v193 = vrot.slane %v188, %v192
    %v211 = vunpack.c.l.b16 %v172
    %v212 = vunpack.c.l.b16 %v173
    %v213 = vunpack.c.l.b16 %v174
    %v214 = vunpack.c.l.b16 %v175
    %v215 = vunpack.c.l.b16 %v176
    %v216 = vunpack.c.l.b16 %v177
    %v217 = vunpack.c.l.b16 %v178
    %v218 = vunpack.c.l.b16 %v179
    %v219 = vunpack.c.l.b16 %v180
    %v220 = vunpack.c.l.b16 %v181
    %v221 = vunpack.c.l.b16 %v182
    %v222 = vunpack.c.l.b16 %v183
    %v223 = vunpack.c.l.b16 %v184
    %v224 = vunpack.c.l.b16 %v185
    %v225 = vunpack.c.l.b16 %v186
    %v226 = vunpack.c.l.b16 %v187
    %v227 = vpack.c.b16 %v212, %v211
    %v228 = vpack.c.b16 %v214, %v213
    %v229 = vpack.c.b16 %v216, %v215
    %v230 = vpack.c.b16 %v218, %v217
    %v231 = vpack.c.b16 %v220, %v219
    %v232 = vpack.c.b16 %v222, %v221
    %v233 = vpack.c.b16 %v224, %v223
    %v234 = vpack.c.b16 %v226, %v225
    %243 = vmatprep.subr.bf16.mxu0 0
    %244 = vmatpush1.bf16.msra.mxu0 %v234
    %245 = vmatprep.subr.bf16.mxu0 0
    %246 = vmatpush1.bf16.msra.mxu0 %v233
    %247 = vmatprep.subr.bf16.mxu0 0
    %248 = vmatpush1.bf16.msra.mxu0 %v232
    %249 = vmatprep.subr.bf16.mxu0 0
    %250 = vmatpush1.bf16.msra.mxu0 %v231
    %251 = vmatprep.subr.bf16.mxu0 0
    %252 = vmatpush1.bf16.msra.mxu0 %v230
    %253 = vmatprep.subr.bf16.mxu0 0
    %254 = vmatpush1.bf16.msra.mxu0 %v229
    %255 = vmatprep.subr.bf16.mxu0 0
    %256 = vmatpush1.bf16.msra.mxu0 %v228
    %257 = vmatprep.subr.bf16.mxu0 0
    %258 = vmatpush1.bf16.msra.mxu0 %v227
    %259 = vmatprep.subr.bf16.mxu0 0
    %260 = vmatpush2.bf16.msra.mxu0 0
    %261 = vmatprep.subr.bf16.mxu0 0
    %262 = vmatpush2.bf16.msra.mxu0 0
    %263 = vmatprep.subr.bf16.mxu0 0
    %264 = vmatpush2.bf16.msra.mxu0 0
    %265 = vmatprep.subr.bf16.mxu0 0
    %266 = vmatpush2.bf16.msra.mxu0 0
    %267 = vmatprep.subr.bf16.mxu0 0
    %268 = vmatpush2.bf16.msra.mxu0 0
    %269 = vmatprep.subr.bf16.mxu0 0
    %270 = vmatpush2.bf16.msra.mxu0 0
    %271 = vmatprep.subr.bf16.mxu0 0
    %272 = vmatpush2.bf16.msra.mxu0 0
    %273 = vmatprep.subr.bf16.mxu0 0
    %274 = vmatpush2.bf16.msra.mxu0 0
    %275 = vmatprep.mubr.bf16.mxu0 0
    %276 = vmatmul.mubr.bf16.gmra.mxu0 %v171
    %v277 = vpop.f32.mrf.mxu0
    %v278 = vadd.f32 %v193, %v277
    %v279 = vpop.f32.mrf.mxu0
    %v280 = vpop.f32.mrf.mxu0
    %v281 = vadd.f32 %v193, %v280
    %v282 = vpop.f32.mrf.mxu0
    %283 = vdwg.mxu0
    %284 = vst [vmem:[%s5] sm:$0xff] %v278
    %285 = vst [vmem:[%s5 + $0x8] sm:$0xff] %v281
    // Predicated region
    $region30: #{_two_layer_net_impl.1} parent=1 // pred_check
      _
    $region31: #{_two_layer_net_impl.1} parent=1 // pred_check_branch
      %287 = sbr.rel (0) target = $region33
    $region32: #{_two_layer_net_impl.1} parent=1 // pred_region
      _
    $region33: #{_two_layer_net_impl.1} parent=1 // pred_fallthru
      _
    // Predicated region
    $region34: #{_two_layer_net_impl.1} parent=1 // pred_check
      _
    $region35: #{_two_layer_net_impl.1} parent=1 // pred_check_branch
      %289 = sbr.rel (0) target = $region37
    $region36: #{_two_layer_net_impl.1} parent=1 // pred_region
      _
    $region37: #{_two_layer_net_impl.1} parent=1 // pred_fallthru
      _
    %290 = vsyncpa [#allocation3], 1
    %291 = vsyncpa [#allocation5], 1

</llo_original>
